<compile_context>
chip_gen: v7x
topology: tpu7x:2x2x1
jax: 0.10.0
libtpu: 0.0.40
codegen_flags: <defaults>
</compile_context>

<pallas_src>
import jax
import jax.numpy as jnp
from jax.experimental import pallas as pl
from jax.experimental.pallas import tpu as pltpu

LANE = 128


def _round_up(x, m):
    return (x + m - 1) // m * m


def mlp_kernel(x_ref, w1_ref, b1_ref, w2_ref, b2_ref, w3_ref, b3_ref, o_ref):
    # fc1 + relu  (bf16 x bf16 -> f32 accumulate on MXU)
    h1 = jnp.dot(x_ref[...], w1_ref[...], preferred_element_type=jnp.float32)
    h1 = jnp.maximum(h1 + b1_ref[...], 0.0)
    # fc2 + relu  (N lane-padded to 128: padded cols have zero weights/bias)
    h2 = jnp.dot(h1.astype(jnp.bfloat16), w2_ref[...],
                 preferred_element_type=jnp.float32)
    h2 = jnp.maximum(h2 + b2_ref[...], 0.0)
    # fc3 (lane-padded to 128 outputs; padded bias = -1e30 -> exp == 0 in f32)
    logits = jnp.dot(h2.astype(jnp.bfloat16), w3_ref[...],
                     preferred_element_type=jnp.float32)
    logits = logits + b3_ref[...]
    # numerically stable softmax over the padded class axis
    m = jnp.max(logits, axis=1, keepdims=True)
    e = jnp.exp(logits - m)
    denom = jnp.sum(e, axis=1, keepdims=True)
    # EUP approx reciprocal + one Newton refinement -> near-exact normalization
    r = pl.reciprocal(denom, approx=True)
    r = r * (2.0 - denom * r)
    o_ref[...] = e * r


def prepare_params(params):
    """One-time conversion to kernel layout: bf16 weights, lane-padded dims."""
    w1, b1, w2, b2, w3, b3 = params
    h1 = w1.shape[1]
    h2 = w2.shape[1]
    n_out = w3.shape[1]
    h2_pad = _round_up(h2, LANE)
    n_pad = _round_up(n_out, LANE)

    # Pad hidden-64 -> 128: zero columns in w2/b2 (ReLU keeps them 0),
    # zero rows in w3 (padded activations contribute nothing).
    w2p = jnp.zeros((h1, h2_pad), jnp.float32).at[:, :h2].set(w2)
    b2p = jnp.zeros((1, h2_pad), jnp.float32).at[:, :h2].set(b2)
    w3p = jnp.zeros((h2_pad, n_pad), jnp.float32).at[:h2, :n_out].set(w3)
    # Padded class logits get -1e30 bias -> softmax columns exactly 0 (f32 path).
    b3p = jnp.full((1, n_pad), -1e30, jnp.float32).at[:, :n_out].set(
        b3.astype(jnp.float32))

    return (w1.astype(jnp.bfloat16), b1.astype(jnp.float32),
            w2p.astype(jnp.bfloat16), b2p,
            w3p.astype(jnp.bfloat16), b3p), n_out


def network_forward(x, prepared_params, n_out, *, tm_max=2048,
                    return_padded=False):
    w1, b1, w2, b2, w3, b3 = prepared_params
    if x.dtype != jnp.bfloat16:
        # Producer should emit bf16 directly; cast only as a fallback.
        x = x.astype(jnp.bfloat16)
    B, d_in = x.shape
    h1 = w1.shape[1]
    h2p = w2.shape[1]
    n_pad = w3.shape[1]

    # Batch tile: multiple of 8 sublanes, capped so the working set
    # (bf16 x tile + f32 out tile, double-buffered) stays well under the
    # 32 MiB scoped-VMEM default on every generation (incl. v7x).
    tm = min(tm_max, _round_up(B, 8))
    grid = (pl.cdiv(B, tm),)

    flops = 2 * B * (d_in * h1 + h1 * h2p + h2p * n_pad)
    bytes_accessed = (x.size * 2
                      + w1.size * 2 + w2.size * 2 + w3.size * 2
                      + (b1.size + b2.size + b3.size) * 4
                      + B * n_pad * 4)
    cost = pl.CostEstimate(flops=flops,
                           transcendentals=B * n_pad,
                           bytes_accessed=bytes_accessed)

    const = lambda i: (0, 0)
    out_padded = pl.pallas_call(
        mlp_kernel,
        out_shape=jax.ShapeDtypeStruct((B, n_pad), jnp.float32),
        grid=grid,
        in_specs=[
            pl.BlockSpec((tm, d_in), lambda i: (i, 0)),   # x: tiled over batch
            pl.BlockSpec((d_in, h1), const),              # w1 (VMEM-resident)
            pl.BlockSpec((1, h1), const),                 # b1
            pl.BlockSpec((h1, h2p), const),               # w2 (lane-padded N)
            pl.BlockSpec((1, h2p), const),                # b2 (lane-padded)
            pl.BlockSpec((h2p, n_pad), const),            # w3 (lane-padded)
            pl.BlockSpec((1, n_pad), const),              # b3 (lane-padded)
        ],
        out_specs=pl.BlockSpec((tm, n_pad), lambda i: (i, 0)),
        compiler_params=pltpu.CompilerParams(
            dimension_semantics=("parallel",)),
        cost_estimate=cost,
    )(x, w1, b1, w2, b2, w3, b3)

    if return_padded:
        # Padded columns are exactly 0; real-class probabilities are identical.
        return out_padded
    # Slice lane-padded (B, 128) softmax back to the real class count.
    return out_padded[:, :n_out]


def init_params(key, num_inputs=784, num_hidden=(128, 64), num_outputs=10):
    """Deterministic init matching nn.Linear's U(-1/sqrt(fan_in), 1/sqrt(fan_in))."""
    dims = [num_inputs, num_hidden[0], num_hidden[1], num_outputs]
    params = []
    keys = jax.random.split(key, 6)
    for layer in range(3):
        fan_in, fan_out = dims[layer], dims[layer + 1]
        bound = 1.0 / (fan_in ** 0.5)
        w = jax.random.uniform(keys[2 * layer], (fan_in, fan_out),
                               jnp.float32, -bound, bound)
        b = jax.random.uniform(keys[2 * layer + 1], (1, fan_out),
                               jnp.float32, -bound, bound)
        params += [w, b]
    return tuple(params)


if __name__ == "__main__":
    key = jax.random.PRNGKey(0)
    pkey, xkey = jax.random.split(key)

    num_inputs, num_hidden, num_outputs = 784, (128, 64), 10
    batch = 8

    params = init_params(pkey, num_inputs, num_hidden, num_outputs)
    prepared, n_out = prepare_params(params)
    # Producer emits bf16 directly (no wrapper-side cast op).
    x = jax.random.normal(xkey, (batch, num_inputs), jnp.bfloat16)

    out = network_forward(x, prepared, n_out)
    out = jax.block_until_ready(out)

    # sanity: shape and softmax rows sum to ~1 (f32 softmax path + Newton recip)
    row_sums = jnp.sum(out, axis=1)
    assert out.shape == (batch, num_outputs)
    assert jnp.all(out >= 0.0)
    assert jnp.allclose(row_sums, jnp.ones_like(row_sums), atol=1e-3)

    print("KERNEL_OK")
</pallas_src>

<mosaic_0001>
module attributes {stable_mosaic.version = 11 : i64} {
  func.func @mlp_kernel(%arg0: i32, %arg1: memref<8x784xbf16, #tpu.memory_space<vmem>>, %arg2: memref<784x128xbf16, #tpu.memory_space<vmem>>, %arg3: memref<1x128xf32, #tpu.memory_space<vmem>>, %arg4: memref<128x128xbf16, #tpu.memory_space<vmem>>, %arg5: memref<1x128xf32, #tpu.memory_space<vmem>>, %arg6: memref<128x128xbf16, #tpu.memory_space<vmem>>, %arg7: memref<1x128xf32, #tpu.memory_space<vmem>>, %arg8: memref<8x128xf32, #tpu.memory_space<vmem>>) attributes {dimension_semantics = [#tpu.dimension_semantics<parallel>], iteration_bounds = array<i64: 1>, scalar_prefetch = 0 : i64, scratch_operands = 0 : i64, tpu.core_type = #tpu.core_type<tc>, window_params = [{transform_indices = @transform_0, window_bounds = array<i64: 8, 784>}, {pipeline_mode = #tpu.pipeline_mode<synchronous>, transform_indices = @transform_1, window_bounds = array<i64: 784, 128>}, {pipeline_mode = #tpu.pipeline_mode<synchronous>, transform_indices = @transform_2, window_bounds = array<i64: 1, 128>}, {pipeline_mode = #tpu.pipeline_mode<synchronous>, transform_indices = @transform_3, window_bounds = array<i64: 128, 128>}, {pipeline_mode = #tpu.pipeline_mode<synchronous>, transform_indices = @transform_4, window_bounds = array<i64: 1, 128>}, {pipeline_mode = #tpu.pipeline_mode<synchronous>, transform_indices = @transform_5, window_bounds = array<i64: 128, 128>}, {pipeline_mode = #tpu.pipeline_mode<synchronous>, transform_indices = @transform_6, window_bounds = array<i64: 1, 128>}, {transform_indices = @transform_7, window_bounds = array<i64: 8, 128>}]} {
    %c0 = arith.constant 0 : index
    %c0_0 = arith.constant 0 : index
    %0 = vector.load %arg1[%c0, %c0_0] : memref<8x784xbf16, #tpu.memory_space<vmem>>, vector<8x784xbf16>
    %c0_1 = arith.constant 0 : index
    %c0_2 = arith.constant 0 : index
    %1 = vector.load %arg2[%c0_1, %c0_2] : memref<784x128xbf16, #tpu.memory_space<vmem>>, vector<784x128xbf16>
    %cst = arith.constant dense<0.000000e+00> : vector<8x128xf32>
    %2 = tpu.matmul %0, %1, %cst {dimension_numbers = #tpu.dot_dimension_numbers<[1], [0], [0], [1], [0, 0, 1, 1], [], []>} : vector<8x784xbf16>, vector<784x128xbf16>, vector<8x128xf32> -> vector<8x128xf32>
    %c0_3 = arith.constant 0 : index
    %c0_4 = arith.constant 0 : index
    %3 = vector.load %arg3[%c0_3, %c0_4] : memref<1x128xf32, #tpu.memory_space<vmem>>, vector<1x128xf32>
    %4 = vector.broadcast %3 : vector<1x128xf32> to vector<8x128xf32>
    %5 = arith.addf %2, %4 : vector<8x128xf32>
    %cst_5 = arith.constant 0.000000e+00 : f32
    %6 = vector.broadcast %cst_5 : f32 to vector<8x128xf32>
    %7 = arith.maximumf %5, %6 : vector<8x128xf32>
    %8 = arith.truncf %7 : vector<8x128xf32> to vector<8x128xbf16>
    %c0_6 = arith.constant 0 : index
    %c0_7 = arith.constant 0 : index
    %9 = vector.load %arg4[%c0_6, %c0_7] : memref<128x128xbf16, #tpu.memory_space<vmem>>, vector<128x128xbf16>
    %cst_8 = arith.constant dense<0.000000e+00> : vector<8x128xf32>
    %10 = tpu.matmul %8, %9, %cst_8 {dimension_numbers = #tpu.dot_dimension_numbers<[1], [0], [0], [1], [0, 0, 1, 1], [], []>} : vector<8x128xbf16>, vector<128x128xbf16>, vector<8x128xf32> -> vector<8x128xf32>
    %c0_9 = arith.constant 0 : index
    %c0_10 = arith.constant 0 : index
    %11 = vector.load %arg5[%c0_9, %c0_10] : memref<1x128xf32, #tpu.memory_space<vmem>>, vector<1x128xf32>
    %12 = vector.broadcast %11 : vector<1x128xf32> to vector<8x128xf32>
    %13 = arith.addf %10, %12 : vector<8x128xf32>
    %cst_11 = arith.constant 0.000000e+00 : f32
    %14 = vector.broadcast %cst_11 : f32 to vector<8x128xf32>
    %15 = arith.maximumf %13, %14 : vector<8x128xf32>
    %16 = arith.truncf %15 : vector<8x128xf32> to vector<8x128xbf16>
    %c0_12 = arith.constant 0 : index
    %c0_13 = arith.constant 0 : index
    %17 = vector.load %arg6[%c0_12, %c0_13] : memref<128x128xbf16, #tpu.memory_space<vmem>>, vector<128x128xbf16>
    %cst_14 = arith.constant dense<0.000000e+00> : vector<8x128xf32>
    %18 = tpu.matmul %16, %17, %cst_14 {dimension_numbers = #tpu.dot_dimension_numbers<[1], [0], [0], [1], [0, 0, 1, 1], [], []>} : vector<8x128xbf16>, vector<128x128xbf16>, vector<8x128xf32> -> vector<8x128xf32>
    %c0_15 = arith.constant 0 : index
    %c0_16 = arith.constant 0 : index
    %19 = vector.load %arg7[%c0_15, %c0_16] : memref<1x128xf32, #tpu.memory_space<vmem>>, vector<1x128xf32>
    %20 = vector.broadcast %19 : vector<1x128xf32> to vector<8x128xf32>
    %21 = arith.addf %18, %20 : vector<8x128xf32>
    %cst_17 = arith.constant dense<0xFF800000> : vector<8xf32>
    %22 = vector.multi_reduction <maximumf>, %21, %cst_17 [1] : vector<8x128xf32> to vector<8xf32>
    %23 = vector.shape_cast %22 : vector<8xf32> to vector<8x1xf32>
    %24 = vector.broadcast %23 : vector<8x1xf32> to vector<8x128xf32>
    %25 = arith.subf %21, %24 : vector<8x128xf32>
    %26 = math.exp %25 : vector<8x128xf32>
    %cst_18 = arith.constant dense<0.000000e+00> : vector<8xf32>
    %27 = vector.multi_reduction <add>, %26, %cst_18 [1] : vector<8x128xf32> to vector<8xf32>
    %28 = vector.shape_cast %27 : vector<8xf32> to vector<8x1xf32>
    %29 = tpu.reciprocal %28 {approx = true} : vector<8x1xf32> -> vector<8x1xf32>
    %30 = arith.mulf %28, %29 : vector<8x1xf32>
    %cst_19 = arith.constant 2.000000e+00 : f32
    %31 = vector.broadcast %cst_19 : f32 to vector<8x1xf32>
    %32 = arith.subf %31, %30 : vector<8x1xf32>
    %33 = arith.mulf %29, %32 : vector<8x1xf32>
    %34 = vector.broadcast %33 : vector<8x1xf32> to vector<8x128xf32>
    %35 = arith.mulf %26, %34 : vector<8x128xf32>
    %c0_20 = arith.constant 0 : index
    %c0_21 = arith.constant 0 : index
    %36 = vector.load %arg8[%c0_20, %c0_21] : memref<8x128xf32, #tpu.memory_space<vmem>>, vector<8x128xf32>
    tpu.vector_store %arg8[%c0_20, %c0_21], %35 {strides = array<i32>} : memref<8x128xf32, #tpu.memory_space<vmem>>, vector<8x128xf32>,
    return
  }
  func.func @transform_0(%arg0: i32) -> (i32, i32) {
    %c0_i32 = arith.constant 0 : i32
    %c0_i32_0 = arith.constant 0 : i32
    return %arg0, %c0_i32 : i32, i32
  }
  func.func @transform_1(%arg0: i32) -> (i32, i32) {
    %c0_i32 = arith.constant 0 : i32
    %c0_i32_0 = arith.constant 0 : i32
    %c0_i32_1 = arith.constant 0 : i32
    return %c0_i32, %c0_i32_0 : i32, i32
  }
  func.func @transform_2(%arg0: i32) -> (i32, i32) {
    %c0_i32 = arith.constant 0 : i32
    %c0_i32_0 = arith.constant 0 : i32
    %c0_i32_1 = arith.constant 0 : i32
    return %c0_i32, %c0_i32_0 : i32, i32
  }
  func.func @transform_3(%arg0: i32) -> (i32, i32) {
    %c0_i32 = arith.constant 0 : i32
    %c0_i32_0 = arith.constant 0 : i32
    %c0_i32_1 = arith.constant 0 : i32
    return %c0_i32, %c0_i32_0 : i32, i32
  }
  func.func @transform_4(%arg0: i32) -> (i32, i32) {
    %c0_i32 = arith.constant 0 : i32
    %c0_i32_0 = arith.constant 0 : i32
    %c0_i32_1 = arith.constant 0 : i32
    return %c0_i32, %c0_i32_0 : i32, i32
  }
  func.func @transform_5(%arg0: i32) -> (i32, i32) {
    %c0_i32 = arith.constant 0 : i32
    %c0_i32_0 = arith.constant 0 : i32
    %c0_i32_1 = arith.constant 0 : i32
    return %c0_i32, %c0_i32_0 : i32, i32
  }
  func.func @transform_6(%arg0: i32) -> (i32, i32) {
    %c0_i32 = arith.constant 0 : i32
    %c0_i32_0 = arith.constant 0 : i32
    %c0_i32_1 = arith.constant 0 : i32
    return %c0_i32, %c0_i32_0 : i32, i32
  }
  func.func @transform_7(%arg0: i32) -> (i32, i32) {
    %c0_i32 = arith.constant 0 : i32
    %c0_i32_0 = arith.constant 0 : i32
    return %arg0, %c0_i32 : i32, i32
  }
}

</mosaic_0001>

<llo_original>
// kernel: tpu_custom_call.1
$region0: #{tpu_custom_call.1}
  #allocation0 [shape = 'u32[]', space=smem, size = 0x4, offset = 0x4, fixed_abs, tag = 'smem constant byte address 0x4 - core index']
  #allocation1 [shape = 'u32[144,128]{1,0:T(1,128)}', space=vmem, size = 0x12000, scoped, tag = 'internal scratch']
  %s0 = inlined_call_operand.hbm [shape: bf16[8,784], index: 0, kind: input, shape index: {}]
  %s1 = inlined_call_operand.hbm [shape: bf16[784,128], index: 1, kind: input, shape index: {}]
  %s2 = inlined_call_operand.vmem [shape: f32[1,128], index: 2, kind: input, shape index: {}]
  %s3 = inlined_call_operand.hbm [shape: bf16[128,128], index: 3, kind: input, shape index: {}]
  %s4 = inlined_call_operand.vmem [shape: f32[1,128], index: 4, kind: input, shape index: {}]
  %s5 = inlined_call_operand.hbm [shape: bf16[128,128], index: 5, kind: input, shape index: {}]
  %s6 = inlined_call_operand.vmem [shape: f32[1,128], index: 6, kind: input, shape index: {}]
  %s7 = inlined_call_operand.hbm [shape: f32[8,128], index: 7, kind: output, shape index: {}]
  %s8 = sld [smem:[#allocation0]]
  $region54: #{tpu_custom_call.1} parent=0
    _
  %s10 = ssub.s32 1, %s8
  %s11 = scalar_select 0, %s10, %s8
  $region1: #{tpu_custom_call.1} parent=0
    #allocation2 [shape = 'u8[14336]{0}', space=vmem, size = 0x3800, scoped, tag = 'input window, operand 0, single buffered']
    #allocation3 [shape = 's32[1]{0}', space=sflag, size = 0x4, scoped, tag = 'scoped memory for tpu_custom_call.1']
    #allocation4 [shape = 's32[1]{0}', space=sflag, size = 0x4, scoped, tag = 'scoped memory for tpu_custom_call.1']
    #allocation5 [shape = 'u8[200704]{0}', space=vmem, size = 0x31000, scoped, tag = 'input window, operand 1, single buffered']
    #allocation6 [shape = 's32[1]{0}', space=sflag, size = 0x4, scoped, tag = 'scoped memory for tpu_custom_call.1']
    #allocation7 [shape = 'u8[32768]{0}', space=vmem, size = 0x8000, scoped, tag = 'input window, operand 3, single buffered']
    #allocation8 [shape = 'u8[32768]{0}', space=vmem, size = 0x8000, scoped, tag = 'input window, operand 5, single buffered']
    #allocation9 [shape = 's32[1]{0}', space=sflag, size = 0x4, scoped, tag = 'scoped memory for tpu_custom_call.1']
    #allocation10 [shape = 'u8[4096]{0}', space=vmem, size = 0x1000, scoped, tag = 'output window, operand 0, single buffered']
    %12 = vsyncpa [#allocation3], 0
    %13 = vsyncpa [#allocation6], 0
    %14 = vsyncpa [#allocation9], 0
    %15 = vsyncpa [#allocation4], 0
    // Predicated region
    $region2: #{tpu_custom_call.1} parent=1 // pred_check
      _
    $region3: #{tpu_custom_call.1} parent=1 // pred_check_branch
      %17 = sbr.rel (0) target = $region5
    $region4: #{tpu_custom_call.1} parent=1 // pred_region
      %s19 = ssub.s32 448, 448
      %20 = vsyncadd [#allocation3], %s19
      %s22 = sshll.u32 [#allocation2], 4
      %s23 = int_to_ptr.vmem [resolvable:$true] %s22
      %25 = dma.hbm_to_vmem [thread:$0]  %s0, 448, %s23, [#allocation3]
    $region5: #{tpu_custom_call.1} parent=1 // pred_fallthru
      _
    // Predicated region
    $region6: #{tpu_custom_call.1} parent=1 // pred_check
      _
    $region7: #{tpu_custom_call.1} parent=1 // pred_check_branch
      %27 = sbr.rel (0) target = $region9
    $region8: #{tpu_custom_call.1} parent=1 // pred_region
      %s29 = ssub.s32 6272, 6272
      %30 = vsyncadd [#allocation6], %s29
      %s31 = sshll.u32 [#allocation5], 4
      %s32 = int_to_ptr.vmem [resolvable:$true] %s31
      %37 = dma.hbm_to_vmem [thread:$0]  %s1, 6272, %s32, [#allocation6], 64, 64, 4
    $region9: #{tpu_custom_call.1} parent=1 // pred_fallthru
      _
    // Predicated region
    $region10: #{tpu_custom_call.1} parent=1 // pred_check
      _
    $region11: #{tpu_custom_call.1} parent=1 // pred_check_branch
      %39 = sbr.rel (0) target = $region13
    $region12: #{tpu_custom_call.1} parent=1 // pred_region
      _
    $region13: #{tpu_custom_call.1} parent=1 // pred_fallthru
      _
    // Predicated region
    $region14: #{tpu_custom_call.1} parent=1 // pred_check
      _
    $region15: #{tpu_custom_call.1} parent=1 // pred_check_branch
      %41 = sbr.rel (0) target = $region17
    $region16: #{tpu_custom_call.1} parent=1 // pred_region
      %s43 = ssub.s32 1024, 1024
      %44 = vsyncadd [#allocation6], %s43
      %s45 = sshll.u32 [#allocation7], 4
      %s46 = int_to_ptr.vmem [resolvable:$true] %s45
      %51 = dma.hbm_to_vmem [thread:$0]  %s3, 1024, %s46, [#allocation6], 64, 64, 4
    $region17: #{tpu_custom_call.1} parent=1 // pred_fallthru
      _
    // Predicated region
    $region18: #{tpu_custom_call.1} parent=1 // pred_check
      _
    $region19: #{tpu_custom_call.1} parent=1 // pred_check_branch
      %53 = sbr.rel (0) target = $region21
    $region20: #{tpu_custom_call.1} parent=1 // pred_region
      _
    $region21: #{tpu_custom_call.1} parent=1 // pred_fallthru
      _
    // Predicated region
    $region22: #{tpu_custom_call.1} parent=1 // pred_check
      _
    $region23: #{tpu_custom_call.1} parent=1 // pred_check_branch
      %55 = sbr.rel (0) target = $region25
    $region24: #{tpu_custom_call.1} parent=1 // pred_region
      %s57 = ssub.s32 1024, 1024
      %58 = vsyncadd [#allocation9], %s57
      %s59 = sshll.u32 [#allocation8], 4
      %s60 = int_to_ptr.vmem [resolvable:$true] %s59
      %65 = dma.hbm_to_vmem [thread:$0]  %s5, 1024, %s60, [#allocation9], 64, 64, 4
    $region25: #{tpu_custom_call.1} parent=1 // pred_fallthru
      _
    // Predicated region
    $region26: #{tpu_custom_call.1} parent=1 // pred_check
      _
    $region27: #{tpu_custom_call.1} parent=1 // pred_check_branch
      %67 = sbr.rel (0) target = $region29
    $region28: #{tpu_custom_call.1} parent=1 // pred_region
      _
    $region29: #{tpu_custom_call.1} parent=1 // pred_fallthru
      _
    // Predicated region
    $region30: #{tpu_custom_call.1} parent=1 // pred_check
      _
    $region31: #{tpu_custom_call.1} parent=1 // pred_check_branch
      %69 = sbr.rel (0) target = $region33
    $region32: #{tpu_custom_call.1} parent=1 // pred_region
      %70 = dma.done [#allocation3], 448
    $region33: #{tpu_custom_call.1} parent=1 // pred_fallthru
      _
    // Predicated region
    $region34: #{tpu_custom_call.1} parent=1 // pred_check
      _
    $region35: #{tpu_custom_call.1} parent=1 // pred_check_branch
      %72 = sbr.rel (0) target = $region37
    $region36: #{tpu_custom_call.1} parent=1 // pred_region
      %73 = dma.done [#allocation6], 6272
    $region37: #{tpu_custom_call.1} parent=1 // pred_fallthru
      _
    // Predicated region
    $region38: #{tpu_custom_call.1} parent=1 // pred_check
      _
    $region39: #{tpu_custom_call.1} parent=1 // pred_check_branch
      %75 = sbr.rel (0) target = $region41
    $region40: #{tpu_custom_call.1} parent=1 // pred_region
      %76 = dma.done [#allocation6], 1024
    $region41: #{tpu_custom_call.1} parent=1 // pred_fallthru
      _
    // Predicated region
    $region42: #{tpu_custom_call.1} parent=1 // pred_check
      _
    $region43: #{tpu_custom_call.1} parent=1 // pred_check_branch
      %78 = sbr.rel (0) target = $region45
    $region44: #{tpu_custom_call.1} parent=1 // pred_region
      %79 = dma.done [#allocation9], 1024
    $region45: #{tpu_custom_call.1} parent=1 // pred_fallthru
      _
    %v81 = vld [vmem:[#allocation2] sm:$0xff]
    %v82 = vld [vmem:[#allocation2 + $0x8] sm:$0xff]
    %v83 = vld [vmem:[#allocation2 + $0x10] sm:$0xff]
    %v84 = vld [vmem:[#allocation2 + $0x18] sm:$0xf]
    %v85 = vld [vmem:[#allocation5] sm:$0xf]
    %v86 = vld [vmem:[#allocation5 + $0x4] sm:$0xf]
    %v87 = vld [vmem:[#allocation5 + $0x8] sm:$0xf]
    %v88 = vld [vmem:[#allocation5 + $0xc] sm:$0xf]
    %v89 = vld [vmem:[#allocation5 + $0x10] sm:$0xf]
    %v90 = vld [vmem:[#allocation5 + $0x14] sm:$0xf]
    %v91 = vld [vmem:[#allocation5 + $0x18] sm:$0xf]
    %v92 = vld [vmem:[#allocation5 + $0x1c] sm:$0xf]
    %v93 = vld [vmem:[#allocation5 + $0x20] sm:$0xf]
    %v94 = vld [vmem:[#allocation5 + $0x24] sm:$0xf]
    %v95 = vld [vmem:[#allocation5 + $0x28] sm:$0xf]
    %v96 = vld [vmem:[#allocation5 + $0x2c] sm:$0xf]
    %v97 = vld [vmem:[#allocation5 + $0x30] sm:$0xf]
    %v98 = vld [vmem:[#allocation5 + $0x34] sm:$0xf]
    %v99 = vld [vmem:[#allocation5 + $0x38] sm:$0xf]
    %v100 = vld [vmem:[#allocation5 + $0x3c] sm:$0xf]
    %v101 = vld [vmem:[#allocation5 + $0x40] sm:$0xf]
    %v102 = vld [vmem:[#allocation5 + $0x44] sm:$0xf]
    %v103 = vld [vmem:[#allocation5 + $0x48] sm:$0xf]
    %v104 = vld [vmem:[#allocation5 + $0x4c] sm:$0xf]
    %v105 = vld [vmem:[#allocation5 + $0x50] sm:$0xf]
    %v106 = vld [vmem:[#allocation5 + $0x54] sm:$0xf]
    %v107 = vld [vmem:[#allocation5 + $0x58] sm:$0xf]
    %v108 = vld [vmem:[#allocation5 + $0x5c] sm:$0xf]
    %v109 = vld [vmem:[#allocation5 + $0x60] sm:$0xf]
    %v110 = vld [vmem:[#allocation5 + $0x64] sm:$0xf]
    %v111 = vld [vmem:[#allocation5 + $0x68] sm:$0xf]
    %v112 = vld [vmem:[#allocation5 + $0x6c] sm:$0xf]
    %v113 = vld [vmem:[#allocation5 + $0x70] sm:$0xf]
    %v114 = vld [vmem:[#allocation5 + $0x74] sm:$0xf]
    %v115 = vld [vmem:[#allocation5 + $0x78] sm:$0xf]
    %v116 = vld [vmem:[#allocation5 + $0x7c] sm:$0xf]
    %v117 = vld [vmem:[#allocation5 + $0x80] sm:$0xf]
    %v118 = vld [vmem:[#allocation5 + $0x84] sm:$0xf]
    %v119 = vld [vmem:[#allocation5 + $0x88] sm:$0xf]
    %v120 = vld [vmem:[#allocation5 + $0x8c] sm:$0xf]
    %v121 = vld [vmem:[#allocation5 + $0x90] sm:$0xf]
    %v122 = vld [vmem:[#allocation5 + $0x94] sm:$0xf]
    %v123 = vld [vmem:[#allocation5 + $0x98] sm:$0xf]
    %v124 = vld [vmem:[#allocation5 + $0x9c] sm:$0xf]
    %v125 = vld [vmem:[#allocation5 + $0xa0] sm:$0xf]
    %v126 = vld [vmem:[#allocation5 + $0xa4] sm:$0xf]
    %v127 = vld [vmem:[#allocation5 + $0xa8] sm:$0xf]
    %v128 = vld [vmem:[#allocation5 + $0xac] sm:$0xf]
    %v129 = vld [vmem:[#allocation5 + $0xb0] sm:$0xf]
    %v130 = vld [vmem:[#allocation5 + $0xb4] sm:$0xf]
    %v131 = vld [vmem:[#allocation5 + $0xb8] sm:$0xf]
    %v132 = vld [vmem:[#allocation5 + $0xbc] sm:$0xf]
    %v133 = vld [vmem:[#allocation5 + $0xc0] sm:$0xf]
    %v134 = vld [vmem:[#allocation5 + $0xc4] sm:$0xf]
    %v135 = vld [vmem:[#allocation5 + $0xc8] sm:$0xf]
    %v136 = vld [vmem:[#allocation5 + $0xcc] sm:$0xf]
    %v137 = vld [vmem:[#allocation5 + $0xd0] sm:$0xf]
    %v138 = vld [vmem:[#allocation5 + $0xd4] sm:$0xf]
    %v139 = vld [vmem:[#allocation5 + $0xd8] sm:$0xf]
    %v140 = vld [vmem:[#allocation5 + $0xdc] sm:$0xf]
    %v141 = vld [vmem:[#allocation5 + $0xe0] sm:$0xf]
    %v142 = vld [vmem:[#allocation5 + $0xe4] sm:$0xf]
    %v143 = vld [vmem:[#allocation5 + $0xe8] sm:$0xf]
    %v144 = vld [vmem:[#allocation5 + $0xec] sm:$0xf]
    %v145 = vld [vmem:[#allocation5 + $0xf0] sm:$0xf]
    %v146 = vld [vmem:[#allocation5 + $0xf4] sm:$0xf]
    %v147 = vld [vmem:[#allocation5 + $0xf8] sm:$0xf]
    %v148 = vld [vmem:[#allocation5 + $0xfc] sm:$0xf]
    %v149 = vld [vmem:[#allocation5 + $0x100] sm:$0xf]
    %v150 = vld [vmem:[#allocation5 + $0x104] sm:$0xf]
    %v151 = vld [vmem:[#allocation5 + $0x108] sm:$0xf]
    %v152 = vld [vmem:[#allocation5 + $0x10c] sm:$0xf]
    %v153 = vld [vmem:[#allocation5 + $0x110] sm:$0xf]
    %v154 = vld [vmem:[#allocation5 + $0x114] sm:$0xf]
    %v155 = vld [vmem:[#allocation5 + $0x118] sm:$0xf]
    %v156 = vld [vmem:[#allocation5 + $0x11c] sm:$0xf]
    %v157 = vld [vmem:[#allocation5 + $0x120] sm:$0xf]
    %v158 = vld [vmem:[#allocation5 + $0x124] sm:$0xf]
    %v159 = vld [vmem:[#allocation5 + $0x128] sm:$0xf]
    %v160 = vld [vmem:[#allocation5 + $0x12c] sm:$0xf]
    %v161 = vld [vmem:[#allocation5 + $0x130] sm:$0xf]
    %v162 = vld [vmem:[#allocation5 + $0x134] sm:$0xf]
    %v163 = vld [vmem:[#allocation5 + $0x138] sm:$0xf]
    %v164 = vld [vmem:[#allocation5 + $0x13c] sm:$0xf]
    %v165 = vld [vmem:[#allocation5 + $0x140] sm:$0xf]
    %v166 = vld [vmem:[#allocation5 + $0x144] sm:$0xf]
    %v167 = vld [vmem:[#allocation5 + $0x148] sm:$0xf]
    %v168 = vld [vmem:[#allocation5 + $0x14c] sm:$0xf]
    %v169 = vld [vmem:[#allocation5 + $0x150] sm:$0xf]
    %v170 = vld [vmem:[#allocation5 + $0x154] sm:$0xf]
    %v171 = vld [vmem:[#allocation5 + $0x158] sm:$0xf]
    %v172 = vld [vmem:[#allocation5 + $0x15c] sm:$0xf]
    %v173 = vld [vmem:[#allocation5 + $0x160] sm:$0xf]
    %v174 = vld [vmem:[#allocation5 + $0x164] sm:$0xf]
    %v175 = vld [vmem:[#allocation5 + $0x168] sm:$0xf]
    %v176 = vld [vmem:[#allocation5 + $0x16c] sm:$0xf]
    %v177 = vld [vmem:[#allocation5 + $0x170] sm:$0xf]
    %v178 = vld [vmem:[#allocation5 + $0x174] sm:$0xf]
    %v179 = vld [vmem:[#allocation5 + $0x178] sm:$0xf]
    %v180 = vld [vmem:[#allocation5 + $0x17c] sm:$0xf]
    %v181 = vld [vmem:[#allocation5 + $0x180] sm:$0xf]
    %v182 = vld [vmem:[#allocation5 + $0x184] sm:$0xf]
    %v183 = vld [vmem:[%s2] sm:$0x1]
    %v185 = vlaneseq
    %v186 = vshrl.u32 %v185, 7
    %v187 = vsub.s32 0, %v186
    %v188 = vrot.slane %v183, %v187
    %v194 = vunpack.c.l.b16 %v81
    %v195 = vunpack.c.h.b16 %v81
    %v196 = vunpack.c.l.b16 %v82
    %v197 = vunpack.c.h.b16 %v82
    %v198 = vunpack.c.l.b16 %v83
    %v199 = vunpack.c.h.b16 %v83
    %v200 = vunpack.c.l.b16 %v84
    %v201 = vpack.c.b16 %v194, %v194
    %v202 = vpack.c.b16 %v195, %v195
    %v203 = vpack.c.b16 %v196, %v196
    %v204 = vpack.c.b16 %v197, %v197
    %v205 = vpack.c.b16 %v198, %v198
    %v206 = vpack.c.b16 %v199, %v199
    %v207 = vpack.c.b16 %v200, %v200
    %v312 = vunpack.c.l.b16 %v85
    %v313 = vunpack.c.l.b16 %v86
    %v314 = vunpack.c.l.b16 %v87
    %v315 = vunpack.c.l.b16 %v88
    %v316 = vunpack.c.l.b16 %v89
    %v317 = vunpack.c.l.b16 %v90
    %v318 = vunpack.c.l.b16 %v91
    %v319 = vunpack.c.l.b16 %v92
    %v320 = vunpack.c.l.b16 %v93
    %v321 = vunpack.c.l.b16 %v94
    %v322 = vunpack.c.l.b16 %v95
    %v323 = vunpack.c.l.b16 %v96
    %v324 = vunpack.c.l.b16 %v97
    %v325 = vunpack.c.l.b16 %v98
    %v326 = vunpack.c.l.b16 %v99
    %v327 = vunpack.c.l.b16 %v100
    %v328 = vunpack.c.l.b16 %v101
    %v329 = vunpack.c.l.b16 %v102
    %v330 = vunpack.c.l.b16 %v103
    %v331 = vunpack.c.l.b16 %v104
    %v332 = vunpack.c.l.b16 %v105
    %v333 = vunpack.c.l.b16 %v106
    %v334 = vunpack.c.l.b16 %v107
    %v335 = vunpack.c.l.b16 %v108
    %v336 = vunpack.c.l.b16 %v109
    %v337 = vunpack.c.l.b16 %v110
    %v338 = vunpack.c.l.b16 %v111
    %v339 = vunpack.c.l.b16 %v112
    %v340 = vunpack.c.l.b16 %v113
    %v341 = vunpack.c.l.b16 %v114
    %v342 = vunpack.c.l.b16 %v115
    %v343 = vunpack.c.l.b16 %v116
    %v344 = vunpack.c.l.b16 %v117
    %v345 = vunpack.c.l.b16 %v118
    %v346 = vunpack.c.l.b16 %v119
    %v347 = vunpack.c.l.b16 %v120
    %v348 = vunpack.c.l.b16 %v121
    %v349 = vunpack.c.l.b16 %v122
    %v350 = vunpack.c.l.b16 %v123
    %v351 = vunpack.c.l.b16 %v124
    %v352 = vunpack.c.l.b16 %v125
    %v353 = vunpack.c.l.b16 %v126
    %v354 = vunpack.c.l.b16 %v127
    %v355 = vunpack.c.l.b16 %v128
    %v356 = vunpack.c.l.b16 %v129
    %v357 = vunpack.c.l.b16 %v130
    %v358 = vunpack.c.l.b16 %v131
    %v359 = vunpack.c.l.b16 %v132
    %v360 = vunpack.c.l.b16 %v133
    %v361 = vunpack.c.l.b16 %v134
    %v362 = vunpack.c.l.b16 %v135
    %v363 = vunpack.c.l.b16 %v136
    %v364 = vunpack.c.l.b16 %v137
    %v365 = vunpack.c.l.b16 %v138
    %v366 = vunpack.c.l.b16 %v139
    %v367 = vunpack.c.l.b16 %v140
    %v368 = vunpack.c.l.b16 %v141
    %v369 = vunpack.c.l.b16 %v142
    %v370 = vunpack.c.l.b16 %v143
    %v371 = vunpack.c.l.b16 %v144
    %v372 = vunpack.c.l.b16 %v145
    %v373 = vunpack.c.l.b16 %v146
    %v374 = vunpack.c.l.b16 %v147
    %v375 = vunpack.c.l.b16 %v148
    %v376 = vunpack.c.l.b16 %v149
    %v377 = vunpack.c.l.b16 %v150
    %v378 = vunpack.c.l.b16 %v151
    %v379 = vunpack.c.l.b16 %v152
    %v380 = vunpack.c.l.b16 %v153
    %v381 = vunpack.c.l.b16 %v154
    %v382 = vunpack.c.l.b16 %v155
    %v383 = vunpack.c.l.b16 %v156
    %v384 = vunpack.c.l.b16 %v157
    %v385 = vunpack.c.l.b16 %v158
    %v386 = vunpack.c.l.b16 %v159
    %v387 = vunpack.c.l.b16 %v160
    %v388 = vunpack.c.l.b16 %v161
    %v389 = vunpack.c.l.b16 %v162
    %v390 = vunpack.c.l.b16 %v163
    %v391 = vunpack.c.l.b16 %v164
    %v392 = vunpack.c.l.b16 %v165
    %v393 = vunpack.c.l.b16 %v166
    %v394 = vunpack.c.l.b16 %v167
    %v395 = vunpack.c.l.b16 %v168
    %v396 = vunpack.c.l.b16 %v169
    %v397 = vunpack.c.l.b16 %v170
    %v398 = vunpack.c.l.b16 %v171
    %v399 = vunpack.c.l.b16 %v172
    %v400 = vunpack.c.l.b16 %v173
    %v401 = vunpack.c.l.b16 %v174
    %v402 = vunpack.c.l.b16 %v175
    %v403 = vunpack.c.l.b16 %v176
    %v404 = vunpack.c.l.b16 %v177
    %v405 = vunpack.c.l.b16 %v178
    %v406 = vunpack.c.l.b16 %v179
    %v407 = vunpack.c.l.b16 %v180
    %v408 = vunpack.c.l.b16 %v181
    %v409 = vunpack.c.l.b16 %v182
    %v410 = vpack.c.b16 %v313, %v312
    %v411 = vpack.c.b16 %v315, %v314
    %v412 = vpack.c.b16 %v317, %v316
    %v413 = vpack.c.b16 %v319, %v318
    %v414 = vpack.c.b16 %v321, %v320
    %v415 = vpack.c.b16 %v323, %v322
    %v416 = vpack.c.b16 %v325, %v324
    %v417 = vpack.c.b16 %v327, %v326
    %v418 = vpack.c.b16 %v329, %v328
    %v419 = vpack.c.b16 %v331, %v330
    %v420 = vpack.c.b16 %v333, %v332
    %v421 = vpack.c.b16 %v335, %v334
    %v422 = vpack.c.b16 %v337, %v336
    %v423 = vpack.c.b16 %v339, %v338
    %v424 = vpack.c.b16 %v341, %v340
    %v425 = vpack.c.b16 %v343, %v342
    %v426 = vpack.c.b16 %v345, %v344
    %v427 = vpack.c.b16 %v347, %v346
    %v428 = vpack.c.b16 %v349, %v348
    %v429 = vpack.c.b16 %v351, %v350
    %v430 = vpack.c.b16 %v353, %v352
    %v431 = vpack.c.b16 %v355, %v354
    %v432 = vpack.c.b16 %v357, %v356
    %v433 = vpack.c.b16 %v359, %v358
    %v434 = vpack.c.b16 %v361, %v360
    %v435 = vpack.c.b16 %v363, %v362
    %v436 = vpack.c.b16 %v365, %v364
    %v437 = vpack.c.b16 %v367, %v366
    %v438 = vpack.c.b16 %v369, %v368
    %v439 = vpack.c.b16 %v371, %v370
    %v440 = vpack.c.b16 %v373, %v372
    %v441 = vpack.c.b16 %v375, %v374
    %v442 = vpack.c.b16 %v377, %v376
    %v443 = vpack.c.b16 %v379, %v378
    %v444 = vpack.c.b16 %v381, %v380
    %v445 = vpack.c.b16 %v383, %v382
    %v446 = vpack.c.b16 %v385, %v384
    %v447 = vpack.c.b16 %v387, %v386
    %v448 = vpack.c.b16 %v389, %v388
    %v449 = vpack.c.b16 %v391, %v390
    %v450 = vpack.c.b16 %v393, %v392
    %v451 = vpack.c.b16 %v395, %v394
    %v452 = vpack.c.b16 %v397, %v396
    %v453 = vpack.c.b16 %v399, %v398
    %v454 = vpack.c.b16 %v401, %v400
    %v455 = vpack.c.b16 %v403, %v402
    %v456 = vpack.c.b16 %v405, %v404
    %v457 = vpack.c.b16 %v407, %v406
    %v458 = vpack.c.b16 %v409, %v408
    %vm508 = vcmask 130048
    %v510 = vsel %vm508, %v207, 0
    %512 = vmatprep.subr.bf16.mxu0 0
    %513 = vmatpush1.bf16.msra.mxu0 %v410
    %514 = vmatprep.subr.bf16.mxu0 0
    %515 = vmatpush1.bf16.msra.mxu0 %v411
    %516 = vmatprep.subr.bf16.mxu0 0
    %517 = vmatpush1.bf16.msra.mxu0 %v412
    %518 = vmatprep.subr.bf16.mxu0 0
    %519 = vmatpush1.bf16.msra.mxu0 %v413
    %520 = vmatprep.subr.bf16.mxu0 0
    %521 = vmatpush1.bf16.msra.mxu0 %v414
    %522 = vmatprep.subr.bf16.mxu0 0
    %523 = vmatpush1.bf16.msra.mxu0 %v415
    %524 = vmatprep.subr.bf16.mxu0 0
    %525 = vmatpush1.bf16.msra.mxu0 %v416
    %526 = vmatprep.subr.bf16.mxu0 0
    %527 = vmatpush1.bf16.msra.mxu0 %v417
    %528 = vmatprep.subr.bf16.mxu0 0
    %529 = vmatpush1.bf16.msra.mxu0 %v418
    %530 = vmatprep.subr.bf16.mxu0 0
    %531 = vmatpush1.bf16.msra.mxu0 %v419
    %532 = vmatprep.subr.bf16.mxu0 0
    %533 = vmatpush1.bf16.msra.mxu0 %v420
    %534 = vmatprep.subr.bf16.mxu0 0
    %535 = vmatpush1.bf16.msra.mxu0 %v421
    %536 = vmatprep.subr.bf16.mxu0 0
    %537 = vmatpush1.bf16.msra.mxu0 %v422
    %538 = vmatprep.subr.bf16.mxu0 0
    %539 = vmatpush1.bf16.msra.mxu0 %v423
    %540 = vmatprep.subr.bf16.mxu0 0
    %541 = vmatpush1.bf16.msra.mxu0 %v424
    %542 = vmatprep.subr.bf16.mxu0 0
    %543 = vmatpush1.bf16.msra.mxu0 %v425
    %544 = vmatprep.mubr.bf16.mxu0 %v202
    %545 = vmatmul.mubr.bf16.gmra.mrb[0].mxu0 %v201
    %v546 = vpop.f32.mrb[0].mxu0
    %v547 = vadd.f32 %v188, %v546
    %v548 = vpop.f32.mrb[0].mxu0
    %v549 = vpop.f32.mrb[0].mxu0
    %v550 = vpop.f32.mrb[0].mxu0
    %551 = vdwg.mxu0
    %552 = vmatprep.subr.bf16.mxu0 0
    %553 = vmatpush1.bf16.msra.mxu0 %v426
    %554 = vmatprep.subr.bf16.mxu0 0
    %555 = vmatpush1.bf16.msra.mxu0 %v427
    %556 = vmatprep.subr.bf16.mxu0 0
    %557 = vmatpush1.bf16.msra.mxu0 %v428
    %558 = vmatprep.subr.bf16.mxu0 0
    %559 = vmatpush1.bf16.msra.mxu0 %v429
    %560 = vmatprep.subr.bf16.mxu0 0
    %561 = vmatpush1.bf16.msra.mxu0 %v430
    %562 = vmatprep.subr.bf16.mxu0 0
    %563 = vmatpush1.bf16.msra.mxu0 %v431
    %564 = vmatprep.subr.bf16.mxu0 0
    %565 = vmatpush1.bf16.msra.mxu0 %v432
    %566 = vmatprep.subr.bf16.mxu0 0
    %567 = vmatpush1.bf16.msra.mxu0 %v433
    %568 = vmatprep.subr.bf16.mxu0 0
    %569 = vmatpush1.bf16.msra.mxu0 %v434
    %570 = vmatprep.subr.bf16.mxu0 0
    %571 = vmatpush1.bf16.msra.mxu0 %v435
    %572 = vmatprep.subr.bf16.mxu0 0
    %573 = vmatpush1.bf16.msra.mxu0 %v436
    %574 = vmatprep.subr.bf16.mxu0 0
    %575 = vmatpush1.bf16.msra.mxu0 %v437
    %576 = vmatprep.subr.bf16.mxu0 0
    %577 = vmatpush1.bf16.msra.mxu0 %v438
    %578 = vmatprep.subr.bf16.mxu0 0
    %579 = vmatpush1.bf16.msra.mxu0 %v439
    %580 = vmatprep.subr.bf16.mxu0 0
    %581 = vmatpush1.bf16.msra.mxu0 %v440
    %582 = vmatprep.subr.bf16.mxu0 0
    %583 = vmatpush1.bf16.msra.mxu0 %v441
    %584 = vmatprep.mubr.bf16.mxu0 %v204
    %585 = vmatmul.mubr.bf16.gmra.mrb[0].mxu0 %v203
    %v586 = vpop.f32.mrb[0].mxu0
    %v587 = vadd.f32 %v547, %v586
    %v588 = vpop.f32.mrb[0].mxu0
    %v589 = vpop.f32.mrb[0].mxu0
    %v590 = vpop.f32.mrb[0].mxu0
    %591 = vdwg.mxu0
    %592 = vmatprep.subr.bf16.mxu0 0
    %593 = vmatpush1.bf16.msra.mxu0 %v442
    %594 = vmatprep.subr.bf16.mxu0 0
    %595 = vmatpush1.bf16.msra.mxu0 %v443
    %596 = vmatprep.subr.bf16.mxu0 0
    %597 = vmatpush1.bf16.msra.mxu0 %v444
    %598 = vmatprep.subr.bf16.mxu0 0
    %599 = vmatpush1.bf16.msra.mxu0 %v445
    %600 = vmatprep.subr.bf16.mxu0 0
    %601 = vmatpush1.bf16.msra.mxu0 %v446
    %602 = vmatprep.subr.bf16.mxu0 0
    %603 = vmatpush1.bf16.msra.mxu0 %v447
    %604 = vmatprep.subr.bf16.mxu0 0
    %605 = vmatpush1.bf16.msra.mxu0 %v448
    %606 = vmatprep.subr.bf16.mxu0 0
    %607 = vmatpush1.bf16.msra.mxu0 %v449
    %608 = vmatprep.subr.bf16.mxu0 0
    %609 = vmatpush1.bf16.msra.mxu0 %v450
    %610 = vmatprep.subr.bf16.mxu0 0
    %611 = vmatpush1.bf16.msra.mxu0 %v451
    %612 = vmatprep.subr.bf16.mxu0 0
    %613 = vmatpush1.bf16.msra.mxu0 %v452
    %614 = vmatprep.subr.bf16.mxu0 0
    %615 = vmatpush1.bf16.msra.mxu0 %v453
    %616 = vmatprep.subr.bf16.mxu0 0
    %617 = vmatpush1.bf16.msra.mxu0 %v454
    %618 = vmatprep.subr.bf16.mxu0 0
    %619 = vmatpush1.bf16.msra.mxu0 %v455
    %620 = vmatprep.subr.bf16.mxu0 0
    %621 = vmatpush1.bf16.msra.mxu0 %v456
    %622 = vmatprep.subr.bf16.mxu0 0
    %623 = vmatpush1.bf16.msra.mxu0 %v457
    %624 = vmatprep.mubr.bf16.mxu0 %v206
    %625 = vmatmul.mubr.bf16.gmra.mrb[0].mxu0 %v205
    %v626 = vpop.f32.mrb[0].mxu0
    %v627 = vadd.f32 %v587, %v626
    %v628 = vpop.f32.mrb[0].mxu0
    %v629 = vpop.f32.mrb[0].mxu0
    %v630 = vpop.f32.mrb[0].mxu0
    %631 = vdwg.mxu0
    %632 = vmatprep.subr.bf16.mxu0 0
    %633 = vmatpush1.bf16.msra.mxu0 %v458
    %634 = vmatprep.subr.bf16.mxu0 0
    %635 = vmatpush1.bf16.msra.mxu0 0
    %636 = vmatprep.subr.bf16.mxu0 0
    %637 = vmatpush1.bf16.msra.mxu0 0
    %638 = vmatprep.subr.bf16.mxu0 0
    %639 = vmatpush1.bf16.msra.mxu0 0
    %640 = vmatprep.subr.bf16.mxu0 0
    %641 = vmatpush1.bf16.msra.mxu0 0
    %642 = vmatprep.subr.bf16.mxu0 0
    %643 = vmatpush1.bf16.msra.mxu0 0
    %644 = vmatprep.subr.bf16.mxu0 0
    %645 = vmatpush1.bf16.msra.mxu0 0
    %646 = vmatprep.subr.bf16.mxu0 0
    %647 = vmatpush1.bf16.msra.mxu0 0
    %648 = vmatprep.subr.bf16.mxu0 0
    %649 = vmatpush1.bf16.msra.mxu0 0
    %650 = vmatprep.subr.bf16.mxu0 0
    %651 = vmatpush1.bf16.msra.mxu0 0
    %652 = vmatprep.subr.bf16.mxu0 0
    %653 = vmatpush1.bf16.msra.mxu0 0
    %654 = vmatprep.subr.bf16.mxu0 0
    %655 = vmatpush1.bf16.msra.mxu0 0
    %656 = vmatprep.subr.bf16.mxu0 0
    %657 = vmatpush1.bf16.msra.mxu0 0
    %658 = vmatprep.subr.bf16.mxu0 0
    %659 = vmatpush1.bf16.msra.mxu0 0
    %660 = vmatprep.subr.bf16.mxu0 0
    %661 = vmatpush1.bf16.msra.mxu0 0
    %662 = vmatprep.subr.bf16.mxu0 0
    %663 = vmatpush1.bf16.msra.mxu0 0
    %664 = vmatprep.mubr.bf16.mxu0 0
    %665 = vmatmul.mubr.bf16.gmra.mrb[0].mxu0 %v510
    %v666 = vpop.f32.mrb[0].mxu0
    %v667 = vadd.f32 %v627, %v666
    %v668 = vpop.f32.mrb[0].mxu0
    %v669 = vpop.f32.mrb[0].mxu0
    %v670 = vpop.f32.mrb[0].mxu0
    %671 = vdwg.mxu0
    %v672 = vmax.f32 %v667, 0.0
    %v673 = vpack.c.bf16 %v672, %v672
    %v674 = vld [vmem:[#allocation7] sm:$0xf]
    %v675 = vld [vmem:[#allocation7 + $0x4] sm:$0xf]
    %v676 = vld [vmem:[#allocation7 + $0x8] sm:$0xf]
    %v677 = vld [vmem:[#allocation7 + $0xc] sm:$0xf]
    %v678 = vld [vmem:[#allocation7 + $0x10] sm:$0xf]
    %v679 = vld [vmem:[#allocation7 + $0x14] sm:$0xf]
    %v680 = vld [vmem:[#allocation7 + $0x18] sm:$0xf]
    %v681 = vld [vmem:[#allocation7 + $0x1c] sm:$0xf]
    %v682 = vld [vmem:[#allocation7 + $0x20] sm:$0xf]
    %v683 = vld [vmem:[#allocation7 + $0x24] sm:$0xf]
    %v684 = vld [vmem:[#allocation7 + $0x28] sm:$0xf]
    %v685 = vld [vmem:[#allocation7 + $0x2c] sm:$0xf]
    %v686 = vld [vmem:[#allocation7 + $0x30] sm:$0xf]
    %v687 = vld [vmem:[#allocation7 + $0x34] sm:$0xf]
    %v688 = vld [vmem:[#allocation7 + $0x38] sm:$0xf]
    %v689 = vld [vmem:[#allocation7 + $0x3c] sm:$0xf]
    %v690 = vld [vmem:[%s4] sm:$0x1]
    %v692 = vlaneseq
    %v693 = vshrl.u32 %v692, 7
    %v694 = vsub.s32 0, %v693
    %v695 = vrot.slane %v690, %v694
    %v713 = vunpack.c.l.b16 %v674
    %v714 = vunpack.c.l.b16 %v675
    %v715 = vunpack.c.l.b16 %v676
    %v716 = vunpack.c.l.b16 %v677
    %v717 = vunpack.c.l.b16 %v678
    %v718 = vunpack.c.l.b16 %v679
    %v719 = vunpack.c.l.b16 %v680
    %v720 = vunpack.c.l.b16 %v681
    %v721 = vunpack.c.l.b16 %v682
    %v722 = vunpack.c.l.b16 %v683
    %v723 = vunpack.c.l.b16 %v684
    %v724 = vunpack.c.l.b16 %v685
    %v725 = vunpack.c.l.b16 %v686
    %v726 = vunpack.c.l.b16 %v687
    %v727 = vunpack.c.l.b16 %v688
    %v728 = vunpack.c.l.b16 %v689
    %v729 = vpack.c.b16 %v714, %v713
    %v730 = vpack.c.b16 %v716, %v715
    %v731 = vpack.c.b16 %v718, %v717
    %v732 = vpack.c.b16 %v720, %v719
    %v733 = vpack.c.b16 %v722, %v721
    %v734 = vpack.c.b16 %v724, %v723
    %v735 = vpack.c.b16 %v726, %v725
    %v736 = vpack.c.b16 %v728, %v727
    %745 = vmatprep.subr.bf16.mxu0 0
    %746 = vmatpush1.bf16.msra.mxu0 %v729
    %747 = vmatprep.subr.bf16.mxu0 0
    %748 = vmatpush1.bf16.msra.mxu0 %v730
    %749 = vmatprep.subr.bf16.mxu0 0
    %750 = vmatpush1.bf16.msra.mxu0 %v731
    %751 = vmatprep.subr.bf16.mxu0 0
    %752 = vmatpush1.bf16.msra.mxu0 %v732
    %753 = vmatprep.subr.bf16.mxu0 0
    %754 = vmatpush1.bf16.msra.mxu0 %v733
    %755 = vmatprep.subr.bf16.mxu0 0
    %756 = vmatpush1.bf16.msra.mxu0 %v734
    %757 = vmatprep.subr.bf16.mxu0 0
    %758 = vmatpush1.bf16.msra.mxu0 %v735
    %759 = vmatprep.subr.bf16.mxu0 0
    %760 = vmatpush1.bf16.msra.mxu0 %v736
    %761 = vmatprep.subr.bf16.mxu0 0
    %762 = vmatpush1.bf16.msra.mxu0 0
    %763 = vmatprep.subr.bf16.mxu0 0
    %764 = vmatpush1.bf16.msra.mxu0 0
    %765 = vmatprep.subr.bf16.mxu0 0
    %766 = vmatpush1.bf16.msra.mxu0 0
    %767 = vmatprep.subr.bf16.mxu0 0
    %768 = vmatpush1.bf16.msra.mxu0 0
    %769 = vmatprep.subr.bf16.mxu0 0
    %770 = vmatpush1.bf16.msra.mxu0 0
    %771 = vmatprep.subr.bf16.mxu0 0
    %772 = vmatpush1.bf16.msra.mxu0 0
    %773 = vmatprep.subr.bf16.mxu0 0
    %774 = vmatpush1.bf16.msra.mxu0 0
    %775 = vmatprep.subr.bf16.mxu0 0
    %776 = vmatpush1.bf16.msra.mxu0 0
    %777 = vmatprep.mubr.bf16.mxu0 0
    %778 = vmatmul.mubr.bf16.gmra.mrb[0].mxu0 %v673
    %v779 = vpop.f32.mrb[0].mxu0
    %v780 = vadd.f32 %v695, %v779
    %v781 = vpop.f32.mrb[0].mxu0
    %v782 = vpop.f32.mrb[0].mxu0
    %v783 = vpop.f32.mrb[0].mxu0
    %784 = vdwg.mxu0
    %v785 = vmax.f32 %v780, 0.0
    %v786 = vpack.c.bf16 %v785, %v785
    %v787 = vld [vmem:[#allocation8] sm:$0xf]
    %v788 = vld [vmem:[#allocation8 + $0x4] sm:$0xf]
    %v789 = vld [vmem:[#allocation8 + $0x8] sm:$0xf]
    %v790 = vld [vmem:[#allocation8 + $0xc] sm:$0xf]
    %v791 = vld [vmem:[#allocation8 + $0x10] sm:$0xf]
    %v792 = vld [vmem:[#allocation8 + $0x14] sm:$0xf]
    %v793 = vld [vmem:[#allocation8 + $0x18] sm:$0xf]
    %v794 = vld [vmem:[#allocation8 + $0x1c] sm:$0xf]
    %v795 = vld [vmem:[#allocation8 + $0x20] sm:$0xf]
    %v796 = vld [vmem:[#allocation8 + $0x24] sm:$0xf]
    %v797 = vld [vmem:[#allocation8 + $0x28] sm:$0xf]
    %v798 = vld [vmem:[#allocation8 + $0x2c] sm:$0xf]
    %v799 = vld [vmem:[#allocation8 + $0x30] sm:$0xf]
    %v800 = vld [vmem:[#allocation8 + $0x34] sm:$0xf]
    %v801 = vld [vmem:[#allocation8 + $0x38] sm:$0xf]
    %v802 = vld [vmem:[#allocation8 + $0x3c] sm:$0xf]
    %v803 = vld [vmem:[%s6] sm:$0x1]
    %v805 = vlaneseq
    %v806 = vshrl.u32 %v805, 7
    %v807 = vsub.s32 0, %v806
    %v808 = vrot.slane %v803, %v807
    %v826 = vunpack.c.l.b16 %v787
    %v827 = vunpack.c.l.b16 %v788
    %v828 = vunpack.c.l.b16 %v789
    %v829 = vunpack.c.l.b16 %v790
    %v830 = vunpack.c.l.b16 %v791
    %v831 = vunpack.c.l.b16 %v792
    %v832 = vunpack.c.l.b16 %v793
    %v833 = vunpack.c.l.b16 %v794
    %v834 = vunpack.c.l.b16 %v795
    %v835 = vunpack.c.l.b16 %v796
    %v836 = vunpack.c.l.b16 %v797
    %v837 = vunpack.c.l.b16 %v798
    %v838 = vunpack.c.l.b16 %v799
    %v839 = vunpack.c.l.b16 %v800
    %v840 = vunpack.c.l.b16 %v801
    %v841 = vunpack.c.l.b16 %v802
    %v842 = vpack.c.b16 %v827, %v826
    %v843 = vpack.c.b16 %v829, %v828
    %v844 = vpack.c.b16 %v831, %v830
    %v845 = vpack.c.b16 %v833, %v832
    %v846 = vpack.c.b16 %v835, %v834
    %v847 = vpack.c.b16 %v837, %v836
    %v848 = vpack.c.b16 %v839, %v838
    %v849 = vpack.c.b16 %v841, %v840
    %858 = vmatprep.subr.bf16.mxu0 0
    %859 = vmatpush1.bf16.msra.mxu0 %v842
    %860 = vmatprep.subr.bf16.mxu0 0
    %861 = vmatpush1.bf16.msra.mxu0 %v843
    %862 = vmatprep.subr.bf16.mxu0 0
    %863 = vmatpush1.bf16.msra.mxu0 %v844
    %864 = vmatprep.subr.bf16.mxu0 0
    %865 = vmatpush1.bf16.msra.mxu0 %v845
    %866 = vmatprep.subr.bf16.mxu0 0
    %867 = vmatpush1.bf16.msra.mxu0 %v846
    %868 = vmatprep.subr.bf16.mxu0 0
    %869 = vmatpush1.bf16.msra.mxu0 %v847
    %870 = vmatprep.subr.bf16.mxu0 0
    %871 = vmatpush1.bf16.msra.mxu0 %v848
    %872 = vmatprep.subr.bf16.mxu0 0
    %873 = vmatpush1.bf16.msra.mxu0 %v849
    %874 = vmatprep.subr.bf16.mxu0 0
    %875 = vmatpush1.bf16.msra.mxu0 0
    %876 = vmatprep.subr.bf16.mxu0 0
    %877 = vmatpush1.bf16.msra.mxu0 0
    %878 = vmatprep.subr.bf16.mxu0 0
    %879 = vmatpush1.bf16.msra.mxu0 0
    %880 = vmatprep.subr.bf16.mxu0 0
    %881 = vmatpush1.bf16.msra.mxu0 0
    %882 = vmatprep.subr.bf16.mxu0 0
    %883 = vmatpush1.bf16.msra.mxu0 0
    %884 = vmatprep.subr.bf16.mxu0 0
    %885 = vmatpush1.bf16.msra.mxu0 0
    %886 = vmatprep.subr.bf16.mxu0 0
    %887 = vmatpush1.bf16.msra.mxu0 0
    %888 = vmatprep.subr.bf16.mxu0 0
    %889 = vmatpush1.bf16.msra.mxu0 0
    %890 = vmatprep.mubr.bf16.mxu0 0
    %891 = vmatmul.mubr.bf16.gmra.mrb[0].mxu0 %v786
    %v892 = vpop.f32.mrb[0].mxu0
    %v893 = vadd.f32 %v808, %v892
    %v894 = vpop.f32.mrb[0].mxu0
    %v895 = vpop.f32.mrb[0].mxu0
    %v896 = vpop.f32.mrb[0].mxu0
    %897 = vdwg.mxu0
    %898 = vmax.xlane.f32.xlu0 %v893
    %v899 = vpop.xlane.xlu0 %898
    %v900 = vsub.f32 %v893, %v899
    %v901 = vmul.f32 %v900, 1.442695
    %v902 = vpow.pop %v901
    %903 = vadd.xlane.f32.xlu0 %v902
    %v904 = vpop.xlane.xlu0 %903
    %v905 = vrcp.pop %v904
    %v906 = vmul.f32 %v904, %v905
    %v907 = vsub.f32 2.0, %v906
    %v908 = vmul.f32 %v905, %v907
    %v909 = vmul.f32 %v902, %v908
    %910 = vst [vmem:[#allocation10] sm:$0xff] %v909
    // Predicated region
    $region46: #{tpu_custom_call.1} parent=1 // pred_check
      _
    $region47: #{tpu_custom_call.1} parent=1 // pred_check_branch
      %912 = sbr.rel (0) target = $region49
    $region48: #{tpu_custom_call.1} parent=1 // pred_region
      %s914 = ssub.s32 128, 128
      %915 = vsyncadd [#allocation4], %s914
      %s917 = sshll.u32 [#allocation10], 4
      %s918 = int_to_ptr.vmem [resolvable:$true] %s917
      %920 = dma.vmem_to_hbm [thread:$0]  %s918, 128, %s7, [#allocation4]
    $region49: #{tpu_custom_call.1} parent=1 // pred_fallthru
      _
    // Predicated region
    $region50: #{tpu_custom_call.1} parent=1 // pred_check
      _
    $region51: #{tpu_custom_call.1} parent=1 // pred_check_branch
      %922 = sbr.rel (0) target = $region53
    $region52: #{tpu_custom_call.1} parent=1 // pred_region
      %923 = dma.done [#allocation4], 128
    $region53: #{tpu_custom_call.1} parent=1 // pred_fallthru
      _
    %924 = vsyncpa [#allocation3], 1
    %925 = vsyncpa [#allocation6], 1
    %926 = vsyncpa [#allocation9], 1
    %927 = vsyncpa [#allocation4], 1

</llo_original>
